<compile_context>
chip_gen: v7x
topology: tpu7x:2x2x1
jax: 0.10.0
libtpu: 0.0.40
codegen_flags: <defaults>
</compile_context>

<pallas_src>
import math

import jax
import jax.numpy as jnp
from jax.experimental import pallas as pl
from jax.experimental.pallas import tpu as pltpu

NUM_HEADS = 8


def _attention_fusion_kernel(cnn_ref, vit_ref,
                             wc_ref, bc_ref, wv_ref, bv_ref,
                             wqkv_ref, bqkv_ref, wo_ref, bo_ref,
                             blk_ref, out_ref):
    f32 = jnp.float32
    TB = cnn_ref.shape[0]
    H = wc_ref.shape[1]
    HD = H // NUM_HEADS
    scale = 1.0 / math.sqrt(HD)

    # Token projections: token 0 = CNN features, token 1 = ViT features.
    t0 = jnp.dot(cnn_ref[...], wc_ref[...], preferred_element_type=f32) + bc_ref[...]
    t1 = jnp.dot(vit_ref[...], wv_ref[...], preferred_element_type=f32) + bv_ref[...]

    # Fused QKV: stack the two tokens row-wise -> one (2TB, H) x (H, 3H) matmul.
    t = jnp.concatenate([t0, t1], axis=0)
    qkv = jnp.dot(t, wqkv_ref[...], preferred_element_type=f32) + bqkv_ref[...]
    q0, q1 = qkv[:TB, 0:H],         qkv[TB:, 0:H]
    k0, k1 = qkv[:TB, H:2 * H],     qkv[TB:, H:2 * H]
    v0, v1 = qkv[:TB, 2 * H:3 * H], qkv[TB:, 2 * H:3 * H]

    # Per-head attention scores, broadcast to full head width in one shot:
    # blk[d, e] = 1 iff head(d) == head(e), so (q*k) @ blk sums q·k within each
    # head and leaves the (identical) per-head score on every lane of that head.
    # All four (query, key) token pairs are stacked row-wise -> one MXU op.
    prods = jnp.concatenate([q0 * k0, q0 * k1, q1 * k0, q1 * k1], axis=0)
    s = jnp.dot(prods, blk_ref[...], preferred_element_type=f32) * scale
    s00, s01 = s[0 * TB:1 * TB], s[1 * TB:2 * TB]
    s10, s11 = s[2 * TB:3 * TB], s[3 * TB:4 * TB]

    # Softmax over the length-2 key axis (pure VPU/EUP work, no MXU).
    m0 = jnp.maximum(s00, s01)
    e00 = jnp.exp(s00 - m0)
    e01 = jnp.exp(s01 - m0)
    inv0 = 1.0 / (e00 + e01)
    m1 = jnp.maximum(s10, s11)
    e10 = jnp.exp(s10 - m1)
    e11 = jnp.exp(s11 - m1)
    inv1 = 1.0 / (e10 + e11)

    # Value mixing at full lane width (probabilities already head-broadcast).
    o0 = (e00 * inv0) * v0 + (e01 * inv0) * v1
    o1 = (e10 * inv1) * v0 + (e11 * inv1) * v1

    # Output projection for both tokens in one matmul, then token mean.
    o = jnp.concatenate([o0, o1], axis=0)
    a = jnp.dot(o, wo_ref[...], preferred_element_type=f32) + bo_ref[...]
    out_ref[...] = (a[:TB] + a[TB:]) * 0.5


def _round_up(x, m):
    return (x + m - 1) // m * m


def attention_fusion(cnn, vit, params, *, block_b=256):
    B, Fc = cnn.shape
    Fv = vit.shape[1]
    H = params["wc"].shape[1]
    assert H % NUM_HEADS == 0, "hidden_dim must be divisible by NUM_HEADS"

    # Fused QKV weight/bias (built once in the wrapper, outside the kernel).
    wqkv = jnp.concatenate([params["wq"], params["wk"], params["wvv"]], axis=1)
    bqkv = jnp.concatenate([params["bq"], params["bk"], params["bvv"]], axis=1)

    # Static same-head block mask (H, H): 1 iff two lanes belong to the same head.
    HD = H // NUM_HEADS
    head_id = jnp.arange(H, dtype=jnp.int32) // HD
    blk = (head_id[:, None] == head_id[None, :]).astype(jnp.float32)

    # Batch tile: multiple of 8 (f32 sublanes); pad B so the grid tiles evenly
    # (padded rows compute garbage that is sliced off below).
    TB = min(block_b, _round_up(B, 8))
    n_blocks = pl.cdiv(B, TB)
    B_pad = n_blocks * TB
    if B_pad != B:
        cnn = jnp.pad(cnn, ((0, B_pad - B), (0, 0)))
        vit = jnp.pad(vit, ((0, B_pad - B), (0, 0)))

    def batch_spec(width):
        return pl.BlockSpec((TB, width), lambda i: (i, 0))

    def const_spec(shape):
        return pl.BlockSpec(shape, lambda i: (0, 0))  # resident across grid steps

    out = pl.pallas_call(
        _attention_fusion_kernel,
        out_shape=jax.ShapeDtypeStruct((B_pad, H), jnp.float32),
        grid=(n_blocks,),
        in_specs=[
            batch_spec(Fc),                # cnn
            batch_spec(Fv),                # vit
            const_spec((Fc, H)),           # wc
            const_spec((1, H)),            # bc
            const_spec((Fv, H)),           # wv
            const_spec((1, H)),            # bv
            const_spec((H, 3 * H)),        # wqkv (fused)
            const_spec((1, 3 * H)),        # bqkv (fused)
            const_spec((H, H)),            # wo
            const_spec((1, H)),            # bo
            const_spec((H, H)),            # same-head block mask
        ],
        out_specs=pl.BlockSpec((TB, H), lambda i: (i, 0)),
        compiler_params=pltpu.CompilerParams(
            dimension_semantics=("parallel",),        # megacore on v7x
            vmem_limit_bytes=48 * 1024 * 1024,        # headroom under v7x's 64 MiB
        ),
    )(cnn, vit,
      params["wc"], params["bc"], params["wv"], params["bv"],
      wqkv, bqkv, params["wo"], params["bo"], blk)
    return out[:B]


def init_params(key, cnn_features, vit_features, hidden_dim):
    ks = jax.random.split(key, 12)

    def u(k, shape, fan_in):
        bound = 1.0 / math.sqrt(fan_in)
        return jax.random.uniform(k, shape, jnp.float32, -bound, bound)

    H = hidden_dim
    return dict(
        wc=u(ks[0], (cnn_features, H), cnn_features),
        bc=u(ks[1], (1, H), cnn_features),
        wv=u(ks[2], (vit_features, H), vit_features),
        bv=u(ks[3], (1, H), vit_features),
        wq=u(ks[4], (H, H), H), bq=u(ks[5], (1, H), H),
        wk=u(ks[6], (H, H), H), bk=u(ks[7], (1, H), H),
        wvv=u(ks[8], (H, H), H), bvv=u(ks[9], (1, H), H),
        wo=u(ks[10], (H, H), H), bo=u(ks[11], (1, H), H),
    )


def reference_fusion(cnn, vit, params):
    """Plain-JAX reference mirroring torch.nn.MultiheadAttention semantics."""
    H = params["wc"].shape[1]
    HD = H // NUM_HEADS
    cp = cnn @ params["wc"] + params["bc"]
    vp = vit @ params["wv"] + params["bv"]
    feats = jnp.stack([cp, vp], axis=1)                      # (B, 2, H)
    q = feats @ params["wq"] + params["bq"]
    k = feats @ params["wk"] + params["bk"]
    v = feats @ params["wvv"] + params["bvv"]
    B, S, _ = q.shape
    qh = q.reshape(B, S, NUM_HEADS, HD).transpose(0, 2, 1, 3)
    kh = k.reshape(B, S, NUM_HEADS, HD).transpose(0, 2, 1, 3)
    vh = v.reshape(B, S, NUM_HEADS, HD).transpose(0, 2, 1, 3)
    scores = jnp.einsum("bhqd,bhkd->bhqk", qh, kh) / math.sqrt(HD)
    attn = jax.nn.softmax(scores, axis=-1)
    oh = jnp.einsum("bhqk,bhkd->bhqd", attn, vh)
    o = oh.transpose(0, 2, 1, 3).reshape(B, S, H)
    out = o @ params["wo"] + params["bo"]
    return out.mean(axis=1)


if __name__ == "__main__":
    # Small but TPU-friendly shapes: H=128 => 8 heads of head_dim 16 (lane-dense).
    # TODO(synk): bf16 operand cast (v6e/v7x MXU) left out to keep f32 parity with the reference.
    B, Fc, Fv, H = 4, 32, 48, 128
    key = jax.random.PRNGKey(0)
    k_cnn, k_vit, k_par = jax.random.split(key, 3)
    cnn = jax.random.normal(k_cnn, (B, Fc), jnp.float32)
    vit = jax.random.normal(k_vit, (B, Fv), jnp.float32)
    params = init_params(k_par, Fc, Fv, H)

    out = jax.block_until_ready(attention_fusion(cnn, vit, params))

    ref = reference_fusion(cnn, vit, params)
    if not bool(jnp.allclose(out, ref, rtol=1e-3, atol=1e-3)):
        raise AssertionError("Pallas kernel output does not match JAX reference")

    print("KERNEL_OK")
</pallas_src>

<mosaic_0001>
module attributes {stable_mosaic.version = 11 : i64} {
  func.func @_attention_fusion_kernel(%arg0: i32, %arg1: memref<8x32xf32, #tpu.memory_space<vmem>>, %arg2: memref<8x48xf32, #tpu.memory_space<vmem>>, %arg3: memref<32x128xf32, #tpu.memory_space<vmem>>, %arg4: memref<1x128xf32, #tpu.memory_space<vmem>>, %arg5: memref<48x128xf32, #tpu.memory_space<vmem>>, %arg6: memref<1x128xf32, #tpu.memory_space<vmem>>, %arg7: memref<128x384xf32, #tpu.memory_space<vmem>>, %arg8: memref<1x384xf32, #tpu.memory_space<vmem>>, %arg9: memref<128x128xf32, #tpu.memory_space<vmem>>, %arg10: memref<1x128xf32, #tpu.memory_space<vmem>>, %arg11: memref<128x128xf32, #tpu.memory_space<vmem>>, %arg12: memref<8x128xf32, #tpu.memory_space<vmem>>) attributes {dimension_semantics = [#tpu.dimension_semantics<parallel>], iteration_bounds = array<i64: 1>, scalar_prefetch = 0 : i64, scratch_operands = 0 : i64, tpu.core_type = #tpu.core_type<tc>, window_params = [{transform_indices = @transform_0, window_bounds = array<i64: 8, 32>}, {transform_indices = @transform_1, window_bounds = array<i64: 8, 48>}, {pipeline_mode = #tpu.pipeline_mode<synchronous>, transform_indices = @transform_2, window_bounds = array<i64: 32, 128>}, {pipeline_mode = #tpu.pipeline_mode<synchronous>, transform_indices = @transform_3, window_bounds = array<i64: 1, 128>}, {pipeline_mode = #tpu.pipeline_mode<synchronous>, transform_indices = @transform_4, window_bounds = array<i64: 48, 128>}, {pipeline_mode = #tpu.pipeline_mode<synchronous>, transform_indices = @transform_5, window_bounds = array<i64: 1, 128>}, {pipeline_mode = #tpu.pipeline_mode<synchronous>, transform_indices = @transform_6, window_bounds = array<i64: 128, 384>}, {pipeline_mode = #tpu.pipeline_mode<synchronous>, transform_indices = @transform_7, window_bounds = array<i64: 1, 384>}, {pipeline_mode = #tpu.pipeline_mode<synchronous>, transform_indices = @transform_8, window_bounds = array<i64: 128, 128>}, {pipeline_mode = #tpu.pipeline_mode<synchronous>, transform_indices = @transform_9, window_bounds = array<i64: 1, 128>}, {pipeline_mode = #tpu.pipeline_mode<synchronous>, transform_indices = @transform_10, window_bounds = array<i64: 128, 128>}, {transform_indices = @transform_11, window_bounds = array<i64: 8, 128>}]} {
    %c0 = arith.constant 0 : index
    %c0_0 = arith.constant 0 : index
    %0 = vector.load %arg1[%c0, %c0_0] : memref<8x32xf32, #tpu.memory_space<vmem>>, vector<8x32xf32>
    %c0_1 = arith.constant 0 : index
    %c0_2 = arith.constant 0 : index
    %1 = vector.load %arg3[%c0_1, %c0_2] : memref<32x128xf32, #tpu.memory_space<vmem>>, vector<32x128xf32>
    %cst = arith.constant dense<0.000000e+00> : vector<8x128xf32>
    %2 = tpu.matmul %0, %1, %cst {dimension_numbers = #tpu.dot_dimension_numbers<[1], [0], [0], [1], [0, 0, 1, 1], [], []>} : vector<8x32xf32>, vector<32x128xf32>, vector<8x128xf32> -> vector<8x128xf32>
    %c0_3 = arith.constant 0 : index
    %c0_4 = arith.constant 0 : index
    %3 = vector.load %arg4[%c0_3, %c0_4] : memref<1x128xf32, #tpu.memory_space<vmem>>, vector<1x128xf32>
    %4 = vector.broadcast %3 : vector<1x128xf32> to vector<8x128xf32>
    %5 = arith.addf %2, %4 : vector<8x128xf32>
    %c0_5 = arith.constant 0 : index
    %c0_6 = arith.constant 0 : index
    %6 = vector.load %arg2[%c0_5, %c0_6] : memref<8x48xf32, #tpu.memory_space<vmem>>, vector<8x48xf32>
    %c0_7 = arith.constant 0 : index
    %c0_8 = arith.constant 0 : index
    %7 = vector.load %arg5[%c0_7, %c0_8] : memref<48x128xf32, #tpu.memory_space<vmem>>, vector<48x128xf32>
    %cst_9 = arith.constant dense<0.000000e+00> : vector<8x128xf32>
    %8 = tpu.matmul %6, %7, %cst_9 {dimension_numbers = #tpu.dot_dimension_numbers<[1], [0], [0], [1], [0, 0, 1, 1], [], []>} : vector<8x48xf32>, vector<48x128xf32>, vector<8x128xf32> -> vector<8x128xf32>
    %c0_10 = arith.constant 0 : index
    %c0_11 = arith.constant 0 : index
    %9 = vector.load %arg6[%c0_10, %c0_11] : memref<1x128xf32, #tpu.memory_space<vmem>>, vector<1x128xf32>
    %10 = vector.broadcast %9 : vector<1x128xf32> to vector<8x128xf32>
    %11 = arith.addf %8, %10 : vector<8x128xf32>
    %12 = tpu.concatenate %5, %11 in 0 : vector<8x128xf32>, vector<8x128xf32> -> vector<16x128xf32>
    %c0_12 = arith.constant 0 : index
    %c0_13 = arith.constant 0 : index
    %13 = vector.load %arg7[%c0_12, %c0_13] : memref<128x384xf32, #tpu.memory_space<vmem>>, vector<128x384xf32>
    %cst_14 = arith.constant dense<0.000000e+00> : vector<16x384xf32>
    %14 = tpu.matmul %12, %13, %cst_14 {dimension_numbers = #tpu.dot_dimension_numbers<[1], [0], [0], [1], [0, 0, 1, 1], [], []>} : vector<16x128xf32>, vector<128x384xf32>, vector<16x384xf32> -> vector<16x384xf32>
    %c0_15 = arith.constant 0 : index
    %c0_16 = arith.constant 0 : index
    %15 = vector.load %arg8[%c0_15, %c0_16] : memref<1x384xf32, #tpu.memory_space<vmem>>, vector<1x384xf32>
    %16 = vector.broadcast %15 : vector<1x384xf32> to vector<16x384xf32>
    %17 = arith.addf %14, %16 : vector<16x384xf32>
    %18 = vector.extract_strided_slice %17 {offsets = [0, 0], sizes = [8, 128], strides = [1, 1]} : vector<16x384xf32> to vector<8x128xf32>
    %19 = vector.extract_strided_slice %17 {offsets = [8, 0], sizes = [8, 128], strides = [1, 1]} : vector<16x384xf32> to vector<8x128xf32>
    %20 = vector.extract_strided_slice %17 {offsets = [0, 128], sizes = [8, 128], strides = [1, 1]} : vector<16x384xf32> to vector<8x128xf32>
    %21 = vector.extract_strided_slice %17 {offsets = [8, 128], sizes = [8, 128], strides = [1, 1]} : vector<16x384xf32> to vector<8x128xf32>
    %22 = vector.extract_strided_slice %17 {offsets = [0, 256], sizes = [8, 128], strides = [1, 1]} : vector<16x384xf32> to vector<8x128xf32>
    %23 = vector.extract_strided_slice %17 {offsets = [8, 256], sizes = [8, 128], strides = [1, 1]} : vector<16x384xf32> to vector<8x128xf32>
    %24 = arith.mulf %18, %20 : vector<8x128xf32>
    %25 = arith.mulf %18, %21 : vector<8x128xf32>
    %26 = arith.mulf %19, %20 : vector<8x128xf32>
    %27 = arith.mulf %19, %21 : vector<8x128xf32>
    %28 = tpu.concatenate %24, %25, %26, %27 in 0 : vector<8x128xf32>, vector<8x128xf32>, vector<8x128xf32>, vector<8x128xf32> -> vector<32x128xf32>
    %c0_17 = arith.constant 0 : index
    %c0_18 = arith.constant 0 : index
    %29 = vector.load %arg11[%c0_17, %c0_18] : memref<128x128xf32, #tpu.memory_space<vmem>>, vector<128x128xf32>
    %cst_19 = arith.constant dense<0.000000e+00> : vector<32x128xf32>
    %30 = tpu.matmul %28, %29, %cst_19 {dimension_numbers = #tpu.dot_dimension_numbers<[1], [0], [0], [1], [0, 0, 1, 1], [], []>} : vector<32x128xf32>, vector<128x128xf32>, vector<32x128xf32> -> vector<32x128xf32>
    %cst_20 = arith.constant 2.500000e-01 : f32
    %31 = vector.broadcast %cst_20 : f32 to vector<32x128xf32>
    %32 = arith.mulf %30, %31 : vector<32x128xf32>
    %33 = vector.extract_strided_slice %32 {offsets = [0, 0], sizes = [8, 128], strides = [1, 1]} : vector<32x128xf32> to vector<8x128xf32>
    %34 = vector.extract_strided_slice %32 {offsets = [8, 0], sizes = [8, 128], strides = [1, 1]} : vector<32x128xf32> to vector<8x128xf32>
    %35 = vector.extract_strided_slice %32 {offsets = [16, 0], sizes = [8, 128], strides = [1, 1]} : vector<32x128xf32> to vector<8x128xf32>
    %36 = vector.extract_strided_slice %32 {offsets = [24, 0], sizes = [8, 128], strides = [1, 1]} : vector<32x128xf32> to vector<8x128xf32>
    %37 = arith.maximumf %33, %34 : vector<8x128xf32>
    %38 = arith.subf %33, %37 : vector<8x128xf32>
    %39 = math.exp %38 : vector<8x128xf32>
    %40 = arith.subf %34, %37 : vector<8x128xf32>
    %41 = math.exp %40 : vector<8x128xf32>
    %42 = arith.addf %39, %41 : vector<8x128xf32>
    %cst_21 = arith.constant 1.000000e+00 : f32
    %43 = vector.broadcast %cst_21 : f32 to vector<8x128xf32>
    %44 = arith.divf %43, %42 : vector<8x128xf32>
    %45 = arith.maximumf %35, %36 : vector<8x128xf32>
    %46 = arith.subf %35, %45 : vector<8x128xf32>
    %47 = math.exp %46 : vector<8x128xf32>
    %48 = arith.subf %36, %45 : vector<8x128xf32>
    %49 = math.exp %48 : vector<8x128xf32>
    %50 = arith.addf %47, %49 : vector<8x128xf32>
    %cst_22 = arith.constant 1.000000e+00 : f32
    %51 = vector.broadcast %cst_22 : f32 to vector<8x128xf32>
    %52 = arith.divf %51, %50 : vector<8x128xf32>
    %53 = arith.mulf %39, %44 : vector<8x128xf32>
    %54 = arith.mulf %53, %22 : vector<8x128xf32>
    %55 = arith.mulf %41, %44 : vector<8x128xf32>
    %56 = arith.mulf %55, %23 : vector<8x128xf32>
    %57 = arith.addf %54, %56 : vector<8x128xf32>
    %58 = arith.mulf %47, %52 : vector<8x128xf32>
    %59 = arith.mulf %58, %22 : vector<8x128xf32>
    %60 = arith.mulf %49, %52 : vector<8x128xf32>
    %61 = arith.mulf %60, %23 : vector<8x128xf32>
    %62 = arith.addf %59, %61 : vector<8x128xf32>
    %63 = tpu.concatenate %57, %62 in 0 : vector<8x128xf32>, vector<8x128xf32> -> vector<16x128xf32>
    %c0_23 = arith.constant 0 : index
    %c0_24 = arith.constant 0 : index
    %64 = vector.load %arg9[%c0_23, %c0_24] : memref<128x128xf32, #tpu.memory_space<vmem>>, vector<128x128xf32>
    %cst_25 = arith.constant dense<0.000000e+00> : vector<16x128xf32>
    %65 = tpu.matmul %63, %64, %cst_25 {dimension_numbers = #tpu.dot_dimension_numbers<[1], [0], [0], [1], [0, 0, 1, 1], [], []>} : vector<16x128xf32>, vector<128x128xf32>, vector<16x128xf32> -> vector<16x128xf32>
    %c0_26 = arith.constant 0 : index
    %c0_27 = arith.constant 0 : index
    %66 = vector.load %arg10[%c0_26, %c0_27] : memref<1x128xf32, #tpu.memory_space<vmem>>, vector<1x128xf32>
    %67 = vector.broadcast %66 : vector<1x128xf32> to vector<16x128xf32>
    %68 = arith.addf %65, %67 : vector<16x128xf32>
    %69 = vector.extract_strided_slice %68 {offsets = [0, 0], sizes = [8, 128], strides = [1, 1]} : vector<16x128xf32> to vector<8x128xf32>
    %70 = vector.extract_strided_slice %68 {offsets = [8, 0], sizes = [8, 128], strides = [1, 1]} : vector<16x128xf32> to vector<8x128xf32>
    %71 = arith.addf %69, %70 : vector<8x128xf32>
    %cst_28 = arith.constant 5.000000e-01 : f32
    %72 = vector.broadcast %cst_28 : f32 to vector<8x128xf32>
    %73 = arith.mulf %71, %72 : vector<8x128xf32>
    %c0_29 = arith.constant 0 : index
    %c0_30 = arith.constant 0 : index
    %74 = vector.load %arg12[%c0_29, %c0_30] : memref<8x128xf32, #tpu.memory_space<vmem>>, vector<8x128xf32>
    tpu.vector_store %arg12[%c0_29, %c0_30], %73 {strides = array<i32>} : memref<8x128xf32, #tpu.memory_space<vmem>>, vector<8x128xf32>,
    return
  }
  func.func @transform_0(%arg0: i32) -> (i32, i32) {
    %c0_i32 = arith.constant 0 : i32
    %c0_i32_0 = arith.constant 0 : i32
    return %arg0, %c0_i32 : i32, i32
  }
  func.func @transform_1(%arg0: i32) -> (i32, i32) {
    %c0_i32 = arith.constant 0 : i32
    %c0_i32_0 = arith.constant 0 : i32
    return %arg0, %c0_i32 : i32, i32
  }
  func.func @transform_2(%arg0: i32) -> (i32, i32) {
    %c0_i32 = arith.constant 0 : i32
    %c0_i32_0 = arith.constant 0 : i32
    %c0_i32_1 = arith.constant 0 : i32
    return %c0_i32, %c0_i32_0 : i32, i32
  }
  func.func @transform_3(%arg0: i32) -> (i32, i32) {
    %c0_i32 = arith.constant 0 : i32
    %c0_i32_0 = arith.constant 0 : i32
    %c0_i32_1 = arith.constant 0 : i32
    return %c0_i32, %c0_i32_0 : i32, i32
  }
  func.func @transform_4(%arg0: i32) -> (i32, i32) {
    %c0_i32 = arith.constant 0 : i32
    %c0_i32_0 = arith.constant 0 : i32
    %c0_i32_1 = arith.constant 0 : i32
    return %c0_i32, %c0_i32_0 : i32, i32
  }
  func.func @transform_5(%arg0: i32) -> (i32, i32) {
    %c0_i32 = arith.constant 0 : i32
    %c0_i32_0 = arith.constant 0 : i32
    %c0_i32_1 = arith.constant 0 : i32
    return %c0_i32, %c0_i32_0 : i32, i32
  }
  func.func @transform_6(%arg0: i32) -> (i32, i32) {
    %c0_i32 = arith.constant 0 : i32
    %c0_i32_0 = arith.constant 0 : i32
    %c0_i32_1 = arith.constant 0 : i32
    return %c0_i32, %c0_i32_0 : i32, i32
  }
  func.func @transform_7(%arg0: i32) -> (i32, i32) {
    %c0_i32 = arith.constant 0 : i32
    %c0_i32_0 = arith.constant 0 : i32
    %c0_i32_1 = arith.constant 0 : i32
    return %c0_i32, %c0_i32_0 : i32, i32
  }
  func.func @transform_8(%arg0: i32) -> (i32, i32) {
    %c0_i32 = arith.constant 0 : i32
    %c0_i32_0 = arith.constant 0 : i32
    %c0_i32_1 = arith.constant 0 : i32
    return %c0_i32, %c0_i32_0 : i32, i32
  }
  func.func @transform_9(%arg0: i32) -> (i32, i32) {
    %c0_i32 = arith.constant 0 : i32
    %c0_i32_0 = arith.constant 0 : i32
    %c0_i32_1 = arith.constant 0 : i32
    return %c0_i32, %c0_i32_0 : i32, i32
  }
  func.func @transform_10(%arg0: i32) -> (i32, i32) {
    %c0_i32 = arith.constant 0 : i32
    %c0_i32_0 = arith.constant 0 : i32
    %c0_i32_1 = arith.constant 0 : i32
    return %c0_i32, %c0_i32_0 : i32, i32
  }
  func.func @transform_11(%arg0: i32) -> (i32, i32) {
    %c0_i32 = arith.constant 0 : i32
    %c0_i32_0 = arith.constant 0 : i32
    return %arg0, %c0_i32 : i32, i32
  }
}

</mosaic_0001>

<llo_original>
// kernel: tpu_custom_call.1
$region0: #{tpu_custom_call.1}
  #allocation0 [shape = 'u32[]', space=smem, size = 0x4, offset = 0x4, fixed_abs, tag = 'smem constant byte address 0x4 - core index']
  #allocation1 [shape = 'u32[144,128]{1,0:T(1,128)}', space=vmem, size = 0x12000, scoped, tag = 'internal scratch']
  %s0 = inlined_call_operand.hbm [shape: f32[8,32], index: 0, kind: input, shape index: {}]
  %s1 = inlined_call_operand.hbm [shape: f32[8,48], index: 1, kind: input, shape index: {}]
  %s2 = inlined_call_operand.hbm [shape: f32[32,128], index: 2, kind: input, shape index: {}]
  %s3 = inlined_call_operand.vmem [shape: f32[1,128], index: 3, kind: input, shape index: {}]
  %s4 = inlined_call_operand.hbm [shape: f32[48,128], index: 4, kind: input, shape index: {}]
  %s5 = inlined_call_operand.vmem [shape: f32[1,128], index: 5, kind: input, shape index: {}]
  %s6 = inlined_call_operand.hbm [shape: f32[128,384], index: 6, kind: input, shape index: {}]
  %s7 = inlined_call_operand.vmem [shape: f32[1,384], index: 7, kind: input, shape index: {}]
  %s8 = inlined_call_operand.hbm [shape: f32[128,128], index: 8, kind: input, shape index: {}]
  %s9 = inlined_call_operand.vmem [shape: f32[1,128], index: 9, kind: input, shape index: {}]
  %s10 = inlined_call_operand.hbm [shape: f32[128,128], index: 10, kind: input, shape index: {}]
  %s11 = inlined_call_operand.hbm [shape: f32[8,128], index: 11, kind: output, shape index: {}]
  %s12 = sld [smem:[#allocation0]]
  $region82: #{tpu_custom_call.1} parent=0
    _
  %s14 = ssub.s32 1, %s12
  %s15 = scalar_select 0, %s14, %s12
  $region1: #{tpu_custom_call.1} parent=0
    #allocation2 [shape = 'u8[4096]{0}', space=vmem, size = 0x1000, scoped, tag = 'input window, operand 0, single buffered']
    #allocation3 [shape = 's32[1]{0}', space=sflag, size = 0x4, scoped, tag = 'scoped memory for tpu_custom_call.1']
    #allocation4 [shape = 's32[1]{0}', space=sflag, size = 0x4, scoped, tag = 'scoped memory for tpu_custom_call.1']
    #allocation5 [shape = 'u8[4096]{0}', space=vmem, size = 0x1000, scoped, tag = 'input window, operand 1, single buffered']
    #allocation6 [shape = 's32[1]{0}', space=sflag, size = 0x4, scoped, tag = 'scoped memory for tpu_custom_call.1']
    #allocation7 [shape = 'u8[16384]{0}', space=vmem, size = 0x4000, scoped, tag = 'input window, operand 2, single buffered']
    #allocation8 [shape = 'u8[24576]{0}', space=vmem, size = 0x6000, scoped, tag = 'input window, operand 4, single buffered']
    #allocation9 [shape = 's32[1]{0}', space=sflag, size = 0x4, scoped, tag = 'scoped memory for tpu_custom_call.1']
    #allocation10 [shape = 'u8[196608]{0}', space=vmem, size = 0x30000, scoped, tag = 'input window, operand 6, single buffered']
    #allocation11 [shape = 'u8[65536]{0}', space=vmem, size = 0x10000, scoped, tag = 'input window, operand 8, single buffered']
    #allocation12 [shape = 's32[1]{0}', space=sflag, size = 0x4, scoped, tag = 'scoped memory for tpu_custom_call.1']
    #allocation13 [shape = 'u8[65536]{0}', space=vmem, size = 0x10000, scoped, tag = 'input window, operand 10, single buffered']
    #allocation14 [shape = 'u8[4096]{0}', space=vmem, size = 0x1000, scoped, tag = 'output window, operand 0, single buffered']
    %16 = vsyncpa [#allocation3], 0
    %17 = vsyncpa [#allocation6], 0
    %18 = vsyncpa [#allocation9], 0
    %19 = vsyncpa [#allocation12], 0
    %20 = vsyncpa [#allocation4], 0
    // Predicated region
    $region2: #{tpu_custom_call.1} parent=1 // pred_check
      _
    $region3: #{tpu_custom_call.1} parent=1 // pred_check_branch
      %22 = sbr.rel (0) target = $region5
    $region4: #{tpu_custom_call.1} parent=1 // pred_region
      %s24 = ssub.s32 128, 128
      %25 = vsyncadd [#allocation3], %s24
      %s27 = sshll.u32 [#allocation2], 4
      %s28 = int_to_ptr.vmem [resolvable:$true] %s27
      %30 = dma.hbm_to_vmem [thread:$0]  %s0, 128, %s28, [#allocation3]
    $region5: #{tpu_custom_call.1} parent=1 // pred_fallthru
      _
    // Predicated region
    $region6: #{tpu_custom_call.1} parent=1 // pred_check
      _
    $region7: #{tpu_custom_call.1} parent=1 // pred_check_branch
      %32 = sbr.rel (0) target = $region9
    $region8: #{tpu_custom_call.1} parent=1 // pred_region
      %s34 = ssub.s32 128, 128
      %35 = vsyncadd [#allocation6], %s34
      %s37 = sshll.u32 [#allocation5], 4
      %s38 = int_to_ptr.vmem [resolvable:$true] %s37
      %40 = dma.hbm_to_vmem [thread:$0]  %s1, 128, %s38, [#allocation6]
    $region9: #{tpu_custom_call.1} parent=1 // pred_fallthru
      _
    // Predicated region
    $region10: #{tpu_custom_call.1} parent=1 // pred_check
      _
    $region11: #{tpu_custom_call.1} parent=1 // pred_check_branch
      %42 = sbr.rel (0) target = $region13
    $region12: #{tpu_custom_call.1} parent=1 // pred_region
      %s44 = ssub.s32 512, 512
      %45 = vsyncadd [#allocation6], %s44
      %s46 = sshll.u32 [#allocation7], 4
      %s47 = int_to_ptr.vmem [resolvable:$true] %s46
      %52 = dma.hbm_to_vmem [thread:$0]  %s2, 512, %s47, [#allocation6], 128, 128, 8
    $region13: #{tpu_custom_call.1} parent=1 // pred_fallthru
      _
    // Predicated region
    $region14: #{tpu_custom_call.1} parent=1 // pred_check
      _
    $region15: #{tpu_custom_call.1} parent=1 // pred_check_branch
      %54 = sbr.rel (0) target = $region17
    $region16: #{tpu_custom_call.1} parent=1 // pred_region
      _
    $region17: #{tpu_custom_call.1} parent=1 // pred_fallthru
      _
    // Predicated region
    $region18: #{tpu_custom_call.1} parent=1 // pred_check
      _
    $region19: #{tpu_custom_call.1} parent=1 // pred_check_branch
      %56 = sbr.rel (0) target = $region21
    $region20: #{tpu_custom_call.1} parent=1 // pred_region
      %s58 = ssub.s32 768, 768
      %59 = vsyncadd [#allocation9], %s58
      %s60 = sshll.u32 [#allocation8], 4
      %s61 = int_to_ptr.vmem [resolvable:$true] %s60
      %66 = dma.hbm_to_vmem [thread:$0]  %s4, 768, %s61, [#allocation9], 128, 128, 8
    $region21: #{tpu_custom_call.1} parent=1 // pred_fallthru
      _
    // Predicated region
    $region22: #{tpu_custom_call.1} parent=1 // pred_check
      _
    $region23: #{tpu_custom_call.1} parent=1 // pred_check_branch
      %68 = sbr.rel (0) target = $region25
    $region24: #{tpu_custom_call.1} parent=1 // pred_region
      _
    $region25: #{tpu_custom_call.1} parent=1 // pred_fallthru
      _
    // Predicated region
    $region26: #{tpu_custom_call.1} parent=1 // pred_check
      _
    $region27: #{tpu_custom_call.1} parent=1 // pred_check_branch
      %70 = sbr.rel (0) target = $region29
    $region28: #{tpu_custom_call.1} parent=1 // pred_region
      %s72 = ssub.s32 6144, 6144
      %73 = vsyncadd [#allocation9], %s72
      %s74 = sshll.u32 [#allocation10], 4
      %s75 = int_to_ptr.vmem [resolvable:$true] %s74
      %80 = dma.hbm_to_vmem [thread:$0]  %s6, 6144, %s75, [#allocation9], 384, 384, 24
    $region29: #{tpu_custom_call.1} parent=1 // pred_fallthru
      _
    // Predicated region
    $region30: #{tpu_custom_call.1} parent=1 // pred_check
      _
    $region31: #{tpu_custom_call.1} parent=1 // pred_check_branch
      %82 = sbr.rel (0) target = $region33
    $region32: #{tpu_custom_call.1} parent=1 // pred_region
      _
    $region33: #{tpu_custom_call.1} parent=1 // pred_fallthru
      _
    // Predicated region
    $region34: #{tpu_custom_call.1} parent=1 // pred_check
      _
    $region35: #{tpu_custom_call.1} parent=1 // pred_check_branch
      %84 = sbr.rel (0) target = $region37
    $region36: #{tpu_custom_call.1} parent=1 // pred_region
      %s86 = ssub.s32 2048, 2048
      %87 = vsyncadd [#allocation12], %s86
      %s88 = sshll.u32 [#allocation11], 4
      %s89 = int_to_ptr.vmem [resolvable:$true] %s88
      %94 = dma.hbm_to_vmem [thread:$0]  %s8, 2048, %s89, [#allocation12], 128, 128, 8
    $region37: #{tpu_custom_call.1} parent=1 // pred_fallthru
      _
    // Predicated region
    $region38: #{tpu_custom_call.1} parent=1 // pred_check
      _
    $region39: #{tpu_custom_call.1} parent=1 // pred_check_branch
      %96 = sbr.rel (0) target = $region41
    $region40: #{tpu_custom_call.1} parent=1 // pred_region
      _
    $region41: #{tpu_custom_call.1} parent=1 // pred_fallthru
      _
    // Predicated region
    $region42: #{tpu_custom_call.1} parent=1 // pred_check
      _
    $region43: #{tpu_custom_call.1} parent=1 // pred_check_branch
      %98 = sbr.rel (0) target = $region45
    $region44: #{tpu_custom_call.1} parent=1 // pred_region
      %s100 = ssub.s32 2048, 2048
      %101 = vsyncadd [#allocation12], %s100
      %s102 = sshll.u32 [#allocation13], 4
      %s103 = int_to_ptr.vmem [resolvable:$true] %s102
      %108 = dma.hbm_to_vmem [thread:$0]  %s10, 2048, %s103, [#allocation12], 128, 128, 8
    $region45: #{tpu_custom_call.1} parent=1 // pred_fallthru
      _
    // Predicated region
    $region46: #{tpu_custom_call.1} parent=1 // pred_check
      _
    $region47: #{tpu_custom_call.1} parent=1 // pred_check_branch
      %110 = sbr.rel (0) target = $region49
    $region48: #{tpu_custom_call.1} parent=1 // pred_region
      %111 = dma.done [#allocation3], 128
    $region49: #{tpu_custom_call.1} parent=1 // pred_fallthru
      _
    // Predicated region
    $region50: #{tpu_custom_call.1} parent=1 // pred_check
      _
    $region51: #{tpu_custom_call.1} parent=1 // pred_check_branch
      %113 = sbr.rel (0) target = $region53
    $region52: #{tpu_custom_call.1} parent=1 // pred_region
      %114 = dma.done [#allocation6], 128
    $region53: #{tpu_custom_call.1} parent=1 // pred_fallthru
      _
    // Predicated region
    $region54: #{tpu_custom_call.1} parent=1 // pred_check
      _
    $region55: #{tpu_custom_call.1} parent=1 // pred_check_branch
      %116 = sbr.rel (0) target = $region57
    $region56: #{tpu_custom_call.1} parent=1 // pred_region
      %117 = dma.done [#allocation6], 512
    $region57: #{tpu_custom_call.1} parent=1 // pred_fallthru
      _
    // Predicated region
    $region58: #{tpu_custom_call.1} parent=1 // pred_check
      _
    $region59: #{tpu_custom_call.1} parent=1 // pred_check_branch
      %119 = sbr.rel (0) target = $region61
    $region60: #{tpu_custom_call.1} parent=1 // pred_region
      %120 = dma.done [#allocation9], 768
    $region61: #{tpu_custom_call.1} parent=1 // pred_fallthru
      _
    // Predicated region
    $region62: #{tpu_custom_call.1} parent=1 // pred_check
      _
    $region63: #{tpu_custom_call.1} parent=1 // pred_check_branch
      %122 = sbr.rel (0) target = $region65
    $region64: #{tpu_custom_call.1} parent=1 // pred_region
      %123 = dma.done [#allocation9], 6144
    $region65: #{tpu_custom_call.1} parent=1 // pred_fallthru
      _
    // Predicated region
    $region66: #{tpu_custom_call.1} parent=1 // pred_check
      _
    $region67: #{tpu_custom_call.1} parent=1 // pred_check_branch
      %125 = sbr.rel (0) target = $region69
    $region68: #{tpu_custom_call.1} parent=1 // pred_region
      %126 = dma.done [#allocation12], 2048
    $region69: #{tpu_custom_call.1} parent=1 // pred_fallthru
      _
    // Predicated region
    $region70: #{tpu_custom_call.1} parent=1 // pred_check
      _
    $region71: #{tpu_custom_call.1} parent=1 // pred_check_branch
      %128 = sbr.rel (0) target = $region73
    $region72: #{tpu_custom_call.1} parent=1 // pred_region
      %129 = dma.done [#allocation12], 2048
    $region73: #{tpu_custom_call.1} parent=1 // pred_fallthru
      _
    %v130 = vld [vmem:[#allocation2] sm:$0xff]
    %v131 = vld [vmem:[#allocation7] sm:$0xff]
    %v132 = vld [vmem:[#allocation7 + $0x8] sm:$0xff]
    %v133 = vld [vmem:[#allocation7 + $0x10] sm:$0xff]
    %v134 = vld [vmem:[#allocation7 + $0x18] sm:$0xff]
    %v135 = vld [vmem:[%s3] sm:$0x1]
    %v137 = vlaneseq
    %v138 = vshrl.u32 %v137, 7
    %v139 = vsub.s32 0, %v138
    %v140 = vrot.slane %v135, %v139
    %vm142 = vcmask 261120
    %v144 = vsel %vm142, %v130, 0
    %146 = vmatprep.subr.mxu0 0.0
    %147 = vmatpush1.msra.mxu0 %v131
    %148 = vmatprep.subr.mxu0 0.0
    %149 = vmatpush1.msra.mxu0 %v132
    %150 = vmatprep.subr.mxu0 0.0
    %151 = vmatpush1.msra.mxu0 %v133
    %152 = vmatprep.subr.mxu0 0.0
    %153 = vmatpush1.msra.mxu0 %v134
    %154 = vmatprep.subr.mxu0 0.0
    %155 = vmatpush1.msra.mxu0 0.0
    %156 = vmatprep.subr.mxu0 0.0
    %157 = vmatpush1.msra.mxu0 0.0
    %158 = vmatprep.subr.mxu0 0.0
    %159 = vmatpush1.msra.mxu0 0.0
    %160 = vmatprep.subr.mxu0 0.0
    %161 = vmatpush1.msra.mxu0 0.0
    %162 = vmatprep.subr.mxu0 0.0
    %163 = vmatpush1.msra.mxu0 0.0
    %164 = vmatprep.subr.mxu0 0.0
    %165 = vmatpush1.msra.mxu0 0.0
    %166 = vmatprep.subr.mxu0 0.0
    %167 = vmatpush1.msra.mxu0 0.0
    %168 = vmatprep.subr.mxu0 0.0
    %169 = vmatpush1.msra.mxu0 0.0
    %170 = vmatprep.subr.mxu0 0.0
    %171 = vmatpush1.msra.mxu0 0.0
    %172 = vmatprep.subr.mxu0 0.0
    %173 = vmatpush1.msra.mxu0 0.0
    %174 = vmatprep.subr.mxu0 0.0
    %175 = vmatpush1.msra.mxu0 0.0
    %176 = vmatprep.subr.mxu0 0.0
    %177 = vmatpush1.msra.mxu0 0.0
    %178 = vmatprep.subr.mxu0 0.0
    %179 = vmatpush1.msra.mxu0 0.0
    %180 = vmatprep.subr.mxu0 0.0
    %181 = vmatpush1.msra.mxu0 0.0
    %182 = vmatprep.subr.mxu0 0.0
    %183 = vmatpush1.msra.mxu0 0.0
    %184 = vmatprep.subr.mxu0 0.0
    %185 = vmatpush1.msra.mxu0 0.0
    %186 = vmatprep.subr.mxu0 0.0
    %187 = vmatpush1.msra.mxu0 0.0
    %188 = vmatprep.subr.mxu0 0.0
    %189 = vmatpush1.msra.mxu0 0.0
    %190 = vmatprep.subr.mxu0 0.0
    %191 = vmatpush1.msra.mxu0 0.0
    %192 = vmatprep.subr.mxu0 0.0
    %193 = vmatpush1.msra.mxu0 0.0
    %194 = vmatprep.subr.mxu0 0.0
    %195 = vmatpush1.msra.mxu0 0.0
    %196 = vmatprep.subr.mxu0 0.0
    %197 = vmatpush1.msra.mxu0 0.0
    %198 = vmatprep.subr.mxu0 0.0
    %199 = vmatpush1.msra.mxu0 0.0
    %200 = vmatprep.subr.mxu0 0.0
    %201 = vmatpush1.msra.mxu0 0.0
    %202 = vmatprep.subr.mxu0 0.0
    %203 = vmatpush1.msra.mxu0 0.0
    %204 = vmatprep.subr.mxu0 0.0
    %205 = vmatpush1.msra.mxu0 0.0
    %206 = vmatprep.subr.mxu0 0.0
    %207 = vmatpush1.msra.mxu0 0.0
    %208 = vmatprep.subr.mxu0 0.0
    %209 = vmatpush1.msra.mxu0 0.0
    %210 = vmatprep.mubr.f32.mxu0 0.0
    %211 = vmatmul.mubr.f32.gmra.mrb[0].mxu0 %v144
    %v212 = vpop.f32.mrb[0].mxu0
    %v213 = vadd.f32 %v140, %v212
    %v214 = vpop.f32.mrb[0].mxu0
    %215 = vdwg.mxu0
    %v216 = vld [vmem:[#allocation5] sm:$0xff]
    %v217 = vld [vmem:[#allocation8] sm:$0xff]
    %v218 = vld [vmem:[#allocation8 + $0x8] sm:$0xff]
    %v219 = vld [vmem:[#allocation8 + $0x10] sm:$0xff]
    %v220 = vld [vmem:[#allocation8 + $0x18] sm:$0xff]
    %v221 = vld [vmem:[#allocation8 + $0x20] sm:$0xff]
    %v222 = vld [vmem:[#allocation8 + $0x28] sm:$0xff]
    %v223 = vld [vmem:[%s5] sm:$0x1]
    %v225 = vlaneseq
    %v226 = vshrl.u32 %v225, 7
    %v227 = vsub.s32 0, %v226
    %v228 = vrot.slane %v223, %v227
    %vm230 = vcmask 392192
    %v232 = vsel %vm230, %v216, 0
    %234 = vmatprep.subr.mxu0 0.0
    %235 = vmatpush1.msra.mxu0 %v217
    %236 = vmatprep.subr.mxu0 0.0
    %237 = vmatpush1.msra.mxu0 %v218
    %238 = vmatprep.subr.mxu0 0.0
    %239 = vmatpush1.msra.mxu0 %v219
    %240 = vmatprep.subr.mxu0 0.0
    %241 = vmatpush1.msra.mxu0 %v220
    %242 = vmatprep.subr.mxu0 0.0
    %243 = vmatpush1.msra.mxu0 %v221
    %244 = vmatprep.subr.mxu0 0.0
    %245 = vmatpush1.msra.mxu0 %v222
    %246 = vmatprep.subr.mxu0 0.0
    %247 = vmatpush1.msra.mxu0 0.0
    %248 = vmatprep.subr.mxu0 0.0
    %249 = vmatpush1.msra.mxu0 0.0
    %250 = vmatprep.subr.mxu0 0.0
    %251 = vmatpush1.msra.mxu0 0.0
    %252 = vmatprep.subr.mxu0 0.0
    %253 = vmatpush1.msra.mxu0 0.0
    %254 = vmatprep.subr.mxu0 0.0
    %255 = vmatpush1.msra.mxu0 0.0
    %256 = vmatprep.subr.mxu0 0.0
    %257 = vmatpush1.msra.mxu0 0.0
    %258 = vmatprep.subr.mxu0 0.0
    %259 = vmatpush1.msra.mxu0 0.0
    %260 = vmatprep.subr.mxu0 0.0
    %261 = vmatpush1.msra.mxu0 0.0
    %262 = vmatprep.subr.mxu0 0.0
    %263 = vmatpush1.msra.mxu0 0.0
    %264 = vmatprep.subr.mxu0 0.0
    %265 = vmatpush1.msra.mxu0 0.0
    %266 = vmatprep.subr.mxu0 0.0
    %267 = vmatpush1.msra.mxu0 0.0
    %268 = vmatprep.subr.mxu0 0.0
    %269 = vmatpush1.msra.mxu0 0.0
    %270 = vmatprep.subr.mxu0 0.0
    %271 = vmatpush1.msra.mxu0 0.0
    %272 = vmatprep.subr.mxu0 0.0
    %273 = vmatpush1.msra.mxu0 0.0
    %274 = vmatprep.subr.mxu0 0.0
    %275 = vmatpush1.msra.mxu0 0.0
    %276 = vmatprep.subr.mxu0 0.0
    %277 = vmatpush1.msra.mxu0 0.0
    %278 = vmatprep.subr.mxu0 0.0
    %279 = vmatpush1.msra.mxu0 0.0
    %280 = vmatprep.subr.mxu0 0.0
    %281 = vmatpush1.msra.mxu0 0.0
    %282 = vmatprep.subr.mxu0 0.0
    %283 = vmatpush1.msra.mxu0 0.0
    %284 = vmatprep.subr.mxu0 0.0
    %285 = vmatpush1.msra.mxu0 0.0
    %286 = vmatprep.subr.mxu0 0.0
    %287 = vmatpush1.msra.mxu0 0.0
    %288 = vmatprep.subr.mxu0 0.0
    %289 = vmatpush1.msra.mxu0 0.0
    %290 = vmatprep.subr.mxu0 0.0
    %291 = vmatpush1.msra.mxu0 0.0
    %292 = vmatprep.subr.mxu0 0.0
    %293 = vmatpush1.msra.mxu0 0.0
    %294 = vmatprep.subr.mxu0 0.0
    %295 = vmatpush1.msra.mxu0 0.0
    %296 = vmatprep.subr.mxu0 0.0
    %297 = vmatpush1.msra.mxu0 0.0
    %298 = vmatprep.mubr.f32.mxu0 0.0
    %299 = vmatmul.mubr.f32.gmra.mrb[0].mxu0 %v232
    %v300 = vpop.f32.mrb[0].mxu0
    %v301 = vadd.f32 %v228, %v300
    %v302 = vpop.f32.mrb[0].mxu0
    %303 = vdwg.mxu0
    %v304 = vld [vmem:[#allocation10] sm:$0xff]
    %v305 = vld [vmem:[#allocation10 + $0x8] sm:$0xff]
    %v306 = vld [vmem:[#allocation10 + $0x10] sm:$0xff]
    %v307 = vld [vmem:[#allocation10 + $0x18] sm:$0xff]
    %v308 = vld [vmem:[#allocation10 + $0x20] sm:$0xff]
    %v309 = vld [vmem:[#allocation10 + $0x28] sm:$0xff]
    %v310 = vld [vmem:[#allocation10 + $0x30] sm:$0xff]
    %v311 = vld [vmem:[#allocation10 + $0x38] sm:$0xff]
    %v312 = vld [vmem:[#allocation10 + $0x40] sm:$0xff]
    %v313 = vld [vmem:[#allocation10 + $0x48] sm:$0xff]
    %v314 = vld [vmem:[#allocation10 + $0x50] sm:$0xff]
    %v315 = vld [vmem:[#allocation10 + $0x58] sm:$0xff]
    %v316 = vld [vmem:[#allocation10 + $0x60] sm:$0xff]
    %v317 = vld [vmem:[#allocation10 + $0x68] sm:$0xff]
    %v318 = vld [vmem:[#allocation10 + $0x70] sm:$0xff]
    %v319 = vld [vmem:[#allocation10 + $0x78] sm:$0xff]
    %v320 = vld [vmem:[#allocation10 + $0x80] sm:$0xff]
    %v321 = vld [vmem:[#allocation10 + $0x88] sm:$0xff]
    %v322 = vld [vmem:[#allocation10 + $0x90] sm:$0xff]
    %v323 = vld [vmem:[#allocation10 + $0x98] sm:$0xff]
    %v324 = vld [vmem:[#allocation10 + $0xa0] sm:$0xff]
    %v325 = vld [vmem:[#allocation10 + $0xa8] sm:$0xff]
    %v326 = vld [vmem:[#allocation10 + $0xb0] sm:$0xff]
    %v327 = vld [vmem:[#allocation10 + $0xb8] sm:$0xff]
    %v328 = vld [vmem:[#allocation10 + $0xc0] sm:$0xff]
    %v329 = vld [vmem:[#allocation10 + $0xc8] sm:$0xff]
    %v330 = vld [vmem:[#allocation10 + $0xd0] sm:$0xff]
    %v331 = vld [vmem:[#allocation10 + $0xd8] sm:$0xff]
    %v332 = vld [vmem:[#allocation10 + $0xe0] sm:$0xff]
    %v333 = vld [vmem:[#allocation10 + $0xe8] sm:$0xff]
    %v334 = vld [vmem:[#allocation10 + $0xf0] sm:$0xff]
    %v335 = vld [vmem:[#allocation10 + $0xf8] sm:$0xff]
    %v336 = vld [vmem:[#allocation10 + $0x100] sm:$0xff]
    %v337 = vld [vmem:[#allocation10 + $0x108] sm:$0xff]
    %v338 = vld [vmem:[#allocation10 + $0x110] sm:$0xff]
    %v339 = vld [vmem:[#allocation10 + $0x118] sm:$0xff]
    %v340 = vld [vmem:[#allocation10 + $0x120] sm:$0xff]
    %v341 = vld [vmem:[#allocation10 + $0x128] sm:$0xff]
    %v342 = vld [vmem:[#allocation10 + $0x130] sm:$0xff]
    %v343 = vld [vmem:[#allocation10 + $0x138] sm:$0xff]
    %v344 = vld [vmem:[#allocation10 + $0x140] sm:$0xff]
    %v345 = vld [vmem:[#allocation10 + $0x148] sm:$0xff]
    %v346 = vld [vmem:[#allocation10 + $0x150] sm:$0xff]
    %v347 = vld [vmem:[#allocation10 + $0x158] sm:$0xff]
    %v348 = vld [vmem:[#allocation10 + $0x160] sm:$0xff]
    %v349 = vld [vmem:[#allocation10 + $0x168] sm:$0xff]
    %v350 = vld [vmem:[#allocation10 + $0x170] sm:$0xff]
    %v351 = vld [vmem:[#allocation10 + $0x178] sm:$0xff]
    %v352 = vld [vmem:[%s7] sm:$0x7]
    %v354 = vlaneseq
    %v355 = vshrl.u32 %v354, 7
    %v356 = vsub.s32 0, %v355
    %v357 = vrot.slane %v352, %v356
    %v358 = vlaneseq
    %v359 = vshrl.u32 %v358, 7
    %v360 = vsub.s32 1, %v359
    %v361 = vrot.slane %v352, %v360
    %v362 = vlaneseq
    %v363 = vshrl.u32 %v362, 7
    %v364 = vsub.s32 2, %v363
    %v365 = vrot.slane %v352, %v364
    %369 = vmatprep.subr.mxu0 %v305
    %370 = vmatpush1.msra.mxu0 %v304
    %371 = vmatprep.subr.mxu0 %v308
    %372 = vmatpush1.msra.mxu0 %v307
    %373 = vmatprep.subr.mxu0 %v311
    %374 = vmatpush1.msra.mxu0 %v310
    %375 = vmatprep.subr.mxu0 %v314
    %376 = vmatpush1.msra.mxu0 %v313
    %377 = vmatprep.subr.mxu0 %v317
    %378 = vmatpush1.msra.mxu0 %v316
    %379 = vmatprep.subr.mxu0 %v320
    %380 = vmatpush1.msra.mxu0 %v319
    %381 = vmatprep.subr.mxu0 %v323
    %382 = vmatpush1.msra.mxu0 %v322
    %383 = vmatprep.subr.mxu0 %v326
    %384 = vmatpush1.msra.mxu0 %v325
    %385 = vmatprep.subr.mxu0 %v329
    %386 = vmatpush1.msra.mxu0 %v328
    %387 = vmatprep.subr.mxu0 %v332
    %388 = vmatpush1.msra.mxu0 %v331
    %389 = vmatprep.subr.mxu0 %v335
    %390 = vmatpush1.msra.mxu0 %v334
    %391 = vmatprep.subr.mxu0 %v338
    %392 = vmatpush1.msra.mxu0 %v337
    %393 = vmatprep.subr.mxu0 %v341
    %394 = vmatpush1.msra.mxu0 %v340
    %395 = vmatprep.subr.mxu0 %v344
    %396 = vmatpush1.msra.mxu0 %v343
    %397 = vmatprep.subr.mxu0 %v347
    %398 = vmatpush1.msra.mxu0 %v346
    %399 = vmatprep.subr.mxu0 %v350
    %400 = vmatpush1.msra.mxu0 %v349
    %401 = vmatprep.subr.mxu0 0.0
    %402 = vmatpush1.msra.mxu0 0.0
    %403 = vmatprep.subr.mxu0 0.0
    %404 = vmatpush1.msra.mxu0 0.0
    %405 = vmatprep.subr.mxu0 0.0
    %406 = vmatpush1.msra.mxu0 0.0
    %407 = vmatprep.subr.mxu0 0.0
    %408 = vmatpush1.msra.mxu0 0.0
    %409 = vmatprep.subr.mxu0 0.0
    %410 = vmatpush1.msra.mxu0 0.0
    %411 = vmatprep.subr.mxu0 0.0
    %412 = vmatpush1.msra.mxu0 0.0
    %413 = vmatprep.subr.mxu0 0.0
    %414 = vmatpush1.msra.mxu0 0.0
    %415 = vmatprep.subr.mxu0 0.0
    %416 = vmatpush1.msra.mxu0 0.0
    %417 = vmatprep.subr.mxu0 0.0
    %418 = vmatpush1.msra.mxu0 0.0
    %419 = vmatprep.subr.mxu0 0.0
    %420 = vmatpush1.msra.mxu0 0.0
    %421 = vmatprep.subr.mxu0 0.0
    %422 = vmatpush1.msra.mxu0 0.0
    %423 = vmatprep.subr.mxu0 0.0
    %424 = vmatpush1.msra.mxu0 0.0
    %425 = vmatprep.subr.mxu0 0.0
    %426 = vmatpush1.msra.mxu0 0.0
    %427 = vmatprep.subr.mxu0 0.0
    %428 = vmatpush1.msra.mxu0 0.0
    %429 = vmatprep.subr.mxu0 0.0
    %430 = vmatpush1.msra.mxu0 0.0
    %431 = vmatprep.subr.mxu0 0.0
    %432 = vmatpush1.msra.mxu0 0.0
    %433 = vmatprep.mubr.f32.mxu0 0.0
    %434 = vmatmul.mubr.f32.gmra.mrb[0].mxu0 %v213
    %v435 = vpop.f32.mrb[0].mxu0
    %v436 = vadd.f32 %v357, %v435
    %v437 = vpop.f32.mrb[0].mxu0
    %v438 = vadd.f32 %v361, %v437
    %439 = vmatprep.mubr.f32.mxu0 0.0
    %440 = vmatmul.mubr.f32.gmra.mrb[0].mxu0 %v301
    %v441 = vpop.f32.mrb[0].mxu0
    %v442 = vadd.f32 %v357, %v441
    %v443 = vpop.f32.mrb[0].mxu0
    %v444 = vadd.f32 %v361, %v443
    %445 = vdwg.mxu0
    %446 = vmatprep.subr.mxu0 0.0
    %447 = vmatpush1.msra.mxu0 %v306
    %448 = vmatprep.subr.mxu0 0.0
    %449 = vmatpush1.msra.mxu0 %v309
    %450 = vmatprep.subr.mxu0 0.0
    %451 = vmatpush1.msra.mxu0 %v312
    %452 = vmatprep.subr.mxu0 0.0
    %453 = vmatpush1.msra.mxu0 %v315
    %454 = vmatprep.subr.mxu0 0.0
    %455 = vmatpush1.msra.mxu0 %v318
    %456 = vmatprep.subr.mxu0 0.0
    %457 = vmatpush1.msra.mxu0 %v321
    %458 = vmatprep.subr.mxu0 0.0
    %459 = vmatpush1.msra.mxu0 %v324
    %460 = vmatprep.subr.mxu0 0.0
    %461 = vmatpush1.msra.mxu0 %v327
    %462 = vmatprep.subr.mxu0 0.0
    %463 = vmatpush1.msra.mxu0 %v330
    %464 = vmatprep.subr.mxu0 0.0
    %465 = vmatpush1.msra.mxu0 %v333
    %466 = vmatprep.subr.mxu0 0.0
    %467 = vmatpush1.msra.mxu0 %v336
    %468 = vmatprep.subr.mxu0 0.0
    %469 = vmatpush1.msra.mxu0 %v339
    %470 = vmatprep.subr.mxu0 0.0
    %471 = vmatpush1.msra.mxu0 %v342
    %472 = vmatprep.subr.mxu0 0.0
    %473 = vmatpush1.msra.mxu0 %v345
    %474 = vmatprep.subr.mxu0 0.0
    %475 = vmatpush1.msra.mxu0 %v348
    %476 = vmatprep.subr.mxu0 0.0
    %477 = vmatpush1.msra.mxu0 %v351
    %478 = vmatprep.subr.mxu0 0.0
    %479 = vmatpush1.msra.mxu0 0.0
    %480 = vmatprep.subr.mxu0 0.0
    %481 = vmatpush1.msra.mxu0 0.0
    %482 = vmatprep.subr.mxu0 0.0
    %483 = vmatpush1.msra.mxu0 0.0
    %484 = vmatprep.subr.mxu0 0.0
    %485 = vmatpush1.msra.mxu0 0.0
    %486 = vmatprep.subr.mxu0 0.0
    %487 = vmatpush1.msra.mxu0 0.0
    %488 = vmatprep.subr.mxu0 0.0
    %489 = vmatpush1.msra.mxu0 0.0
    %490 = vmatprep.subr.mxu0 0.0
    %491 = vmatpush1.msra.mxu0 0.0
    %492 = vmatprep.subr.mxu0 0.0
    %493 = vmatpush1.msra.mxu0 0.0
    %494 = vmatprep.subr.mxu0 0.0
    %495 = vmatpush1.msra.mxu0 0.0
    %496 = vmatprep.subr.mxu0 0.0
    %497 = vmatpush1.msra.mxu0 0.0
    %498 = vmatprep.subr.mxu0 0.0
    %499 = vmatpush1.msra.mxu0 0.0
    %500 = vmatprep.subr.mxu0 0.0
    %501 = vmatpush1.msra.mxu0 0.0
    %502 = vmatprep.subr.mxu0 0.0
    %503 = vmatpush1.msra.mxu0 0.0
    %504 = vmatprep.subr.mxu0 0.0
    %505 = vmatpush1.msra.mxu0 0.0
    %506 = vmatprep.subr.mxu0 0.0
    %507 = vmatpush1.msra.mxu0 0.0
    %508 = vmatprep.subr.mxu0 0.0
    %509 = vmatpush1.msra.mxu0 0.0
    %510 = vmatprep.mubr.f32.mxu0 0.0
    %511 = vmatmul.mubr.f32.gmra.mrb[0].mxu0 %v213
    %v512 = vpop.f32.mrb[0].mxu0
    %v513 = vadd.f32 %v365, %v512
    %v514 = vpop.f32.mrb[0].mxu0
    %515 = vmatprep.mubr.f32.mxu0 0.0
    %516 = vmatmul.mubr.f32.gmra.mrb[0].mxu0 %v301
    %v517 = vpop.f32.mrb[0].mxu0
    %v518 = vadd.f32 %v365, %v517
    %v519 = vpop.f32.mrb[0].mxu0
    %520 = vdwg.mxu0
    %v521 = vmul.f32 %v436, %v438
    %v522 = vmul.f32 %v436, %v444
    %v523 = vmul.f32 %v442, %v438
    %v524 = vmul.f32 %v442, %v444
    %v525 = vld [vmem:[#allocation13] sm:$0xff]
    %v526 = vld [vmem:[#allocation13 + $0x8] sm:$0xff]
    %v527 = vld [vmem:[#allocation13 + $0x10] sm:$0xff]
    %v528 = vld [vmem:[#allocation13 + $0x18] sm:$0xff]
    %v529 = vld [vmem:[#allocation13 + $0x20] sm:$0xff]
    %v530 = vld [vmem:[#allocation13 + $0x28] sm:$0xff]
    %v531 = vld [vmem:[#allocation13 + $0x30] sm:$0xff]
    %v532 = vld [vmem:[#allocation13 + $0x38] sm:$0xff]
    %v533 = vld [vmem:[#allocation13 + $0x40] sm:$0xff]
    %v534 = vld [vmem:[#allocation13 + $0x48] sm:$0xff]
    %v535 = vld [vmem:[#allocation13 + $0x50] sm:$0xff]
    %v536 = vld [vmem:[#allocation13 + $0x58] sm:$0xff]
    %v537 = vld [vmem:[#allocation13 + $0x60] sm:$0xff]
    %v538 = vld [vmem:[#allocation13 + $0x68] sm:$0xff]
    %v539 = vld [vmem:[#allocation13 + $0x70] sm:$0xff]
    %v540 = vld [vmem:[#allocation13 + $0x78] sm:$0xff]
    %541 = vmatprep.subr.mxu0 0.0
    %542 = vmatpush1.msra.mxu0 %v525
    %543 = vmatprep.subr.mxu0 0.0
    %544 = vmatpush1.msra.mxu0 %v526
    %545 = vmatprep.subr.mxu0 0.0
    %546 = vmatpush1.msra.mxu0 %v527
    %547 = vmatprep.subr.mxu0 0.0
    %548 = vmatpush1.msra.mxu0 %v528
    %549 = vmatprep.subr.mxu0 0.0
    %550 = vmatpush1.msra.mxu0 %v529
    %551 = vmatprep.subr.mxu0 0.0
    %552 = vmatpush1.msra.mxu0 %v530
    %553 = vmatprep.subr.mxu0 0.0
    %554 = vmatpush1.msra.mxu0 %v531
    %555 = vmatprep.subr.mxu0 0.0
    %556 = vmatpush1.msra.mxu0 %v532
    %557 = vmatprep.subr.mxu0 0.0
    %558 = vmatpush1.msra.mxu0 %v533
    %559 = vmatprep.subr.mxu0 0.0
    %560 = vmatpush1.msra.mxu0 %v534
    %561 = vmatprep.subr.mxu0 0.0
    %562 = vmatpush1.msra.mxu0 %v535
    %563 = vmatprep.subr.mxu0 0.0
    %564 = vmatpush1.msra.mxu0 %v536
    %565 = vmatprep.subr.mxu0 0.0
    %566 = vmatpush1.msra.mxu0 %v537
    %567 = vmatprep.subr.mxu0 0.0
    %568 = vmatpush1.msra.mxu0 %v538
    %569 = vmatprep.subr.mxu0 0.0
    %570 = vmatpush1.msra.mxu0 %v539
    %571 = vmatprep.subr.mxu0 0.0
    %572 = vmatpush1.msra.mxu0 %v540
    %573 = vmatprep.subr.mxu0 0.0
    %574 = vmatpush1.msra.mxu0 0.0
    %575 = vmatprep.subr.mxu0 0.0
    %576 = vmatpush1.msra.mxu0 0.0
    %577 = vmatprep.subr.mxu0 0.0
    %578 = vmatpush1.msra.mxu0 0.0
    %579 = vmatprep.subr.mxu0 0.0
    %580 = vmatpush1.msra.mxu0 0.0
    %581 = vmatprep.subr.mxu0 0.0
    %582 = vmatpush1.msra.mxu0 0.0
    %583 = vmatprep.subr.mxu0 0.0
    %584 = vmatpush1.msra.mxu0 0.0
    %585 = vmatprep.subr.mxu0 0.0
    %586 = vmatpush1.msra.mxu0 0.0
    %587 = vmatprep.subr.mxu0 0.0
    %588 = vmatpush1.msra.mxu0 0.0
    %589 = vmatprep.subr.mxu0 0.0
    %590 = vmatpush1.msra.mxu0 0.0
    %591 = vmatprep.subr.mxu0 0.0
    %592 = vmatpush1.msra.mxu0 0.0
    %593 = vmatprep.subr.mxu0 0.0
    %594 = vmatpush1.msra.mxu0 0.0
    %595 = vmatprep.subr.mxu0 0.0
    %596 = vmatpush1.msra.mxu0 0.0
    %597 = vmatprep.subr.mxu0 0.0
    %598 = vmatpush1.msra.mxu0 0.0
    %599 = vmatprep.subr.mxu0 0.0
    %600 = vmatpush1.msra.mxu0 0.0
    %601 = vmatprep.subr.mxu0 0.0
    %602 = vmatpush1.msra.mxu0 0.0
    %603 = vmatprep.subr.mxu0 0.0
    %604 = vmatpush1.msra.mxu0 0.0
    %605 = vmatprep.mubr.f32.mxu0 0.0
    %606 = vmatmul.mubr.f32.gmra.mrb[0].mxu0 %v521
    %v607 = vpop.f32.mrb[0].mxu0
    %v608 = vadd.f32 0.0, %v607
    %v609 = vpop.f32.mrb[0].mxu0
    %610 = vmatprep.mubr.f32.mxu0 0.0
    %611 = vmatmul.mubr.f32.gmra.mrb[0].mxu0 %v522
    %v612 = vpop.f32.mrb[0].mxu0
    %v613 = vadd.f32 0.0, %v612
    %v614 = vpop.f32.mrb[0].mxu0
    %615 = vmatprep.mubr.f32.mxu0 0.0
    %616 = vmatmul.mubr.f32.gmra.mrb[0].mxu0 %v523
    %v617 = vpop.f32.mrb[0].mxu0
    %v618 = vadd.f32 0.0, %v617
    %v619 = vpop.f32.mrb[0].mxu0
    %620 = vmatprep.mubr.f32.mxu0 0.0
    %621 = vmatmul.mubr.f32.gmra.mrb[0].mxu0 %v524
    %v622 = vpop.f32.mrb[0].mxu0
    %v623 = vadd.f32 0.0, %v622
    %v624 = vpop.f32.mrb[0].mxu0
    %625 = vdwg.mxu0
    %v626 = vmul.f32 %v608, 0.25
    %v627 = vmul.f32 %v613, 0.25
    %v628 = vmul.f32 %v618, 0.25
    %v629 = vmul.f32 %v623, 0.25
    %v630 = vmax.f32 %v626, %v627
    %v631 = vsub.f32 %v626, %v630
    %v632 = vmul.f32 %v631, 1.442695
    %v633 = vpow.pop %v632
    %v634 = vsub.f32 %v627, %v630
    %v635 = vmul.f32 %v634, 1.442695
    %v636 = vpow.pop %v635
    %v637 = vadd.f32 %v633, %v636
    %v638 = vrcp.pop %v637
    %v639 = vmul.f32 1.0, %v638
    %v640 = vmax.f32 %v628, %v629
    %v641 = vsub.f32 %v628, %v640
    %v642 = vmul.f32 %v641, 1.442695
    %v643 = vpow.pop %v642
    %v644 = vsub.f32 %v629, %v640
    %v645 = vmul.f32 %v644, 1.442695
    %v646 = vpow.pop %v645
    %v647 = vadd.f32 %v643, %v646
    %v648 = vrcp.pop %v647
    %v649 = vmul.f32 1.0, %v648
    %v650 = vmul.f32 %v633, %v639
    %v651 = vmul.f32 %v650, %v513
    %v652 = vmul.f32 %v636, %v639
    %v653 = vmul.f32 %v652, %v518
    %v654 = vadd.f32 %v651, %v653
    %v655 = vmul.f32 %v643, %v649
    %v656 = vmul.f32 %v655, %v513
    %v657 = vmul.f32 %v646, %v649
    %v658 = vmul.f32 %v657, %v518
    %v659 = vadd.f32 %v656, %v658
    %v660 = vld [vmem:[#allocation11] sm:$0xff]
    %v661 = vld [vmem:[#allocation11 + $0x8] sm:$0xff]
    %v662 = vld [vmem:[#allocation11 + $0x10] sm:$0xff]
    %v663 = vld [vmem:[#allocation11 + $0x18] sm:$0xff]
    %v664 = vld [vmem:[#allocation11 + $0x20] sm:$0xff]
    %v665 = vld [vmem:[#allocation11 + $0x28] sm:$0xff]
    %v666 = vld [vmem:[#allocation11 + $0x30] sm:$0xff]
    %v667 = vld [vmem:[#allocation11 + $0x38] sm:$0xff]
    %v668 = vld [vmem:[#allocation11 + $0x40] sm:$0xff]
    %v669 = vld [vmem:[#allocation11 + $0x48] sm:$0xff]
    %v670 = vld [vmem:[#allocation11 + $0x50] sm:$0xff]
    %v671 = vld [vmem:[#allocation11 + $0x58] sm:$0xff]
    %v672 = vld [vmem:[#allocation11 + $0x60] sm:$0xff]
    %v673 = vld [vmem:[#allocation11 + $0x68] sm:$0xff]
    %v674 = vld [vmem:[#allocation11 + $0x70] sm:$0xff]
    %v675 = vld [vmem:[#allocation11 + $0x78] sm:$0xff]
    %v676 = vld [vmem:[%s9] sm:$0x1]
    %v678 = vlaneseq
    %v679 = vshrl.u32 %v678, 7
    %v680 = vsub.s32 0, %v679
    %v681 = vrot.slane %v676, %v680
    %683 = vmatprep.subr.mxu0 0.0
    %684 = vmatpush1.msra.mxu0 %v660
    %685 = vmatprep.subr.mxu0 0.0
    %686 = vmatpush1.msra.mxu0 %v661
    %687 = vmatprep.subr.mxu0 0.0
    %688 = vmatpush1.msra.mxu0 %v662
    %689 = vmatprep.subr.mxu0 0.0
    %690 = vmatpush1.msra.mxu0 %v663
    %691 = vmatprep.subr.mxu0 0.0
    %692 = vmatpush1.msra.mxu0 %v664
    %693 = vmatprep.subr.mxu0 0.0
    %694 = vmatpush1.msra.mxu0 %v665
    %695 = vmatprep.subr.mxu0 0.0
    %696 = vmatpush1.msra.mxu0 %v666
    %697 = vmatprep.subr.mxu0 0.0
    %698 = vmatpush1.msra.mxu0 %v667
    %699 = vmatprep.subr.mxu0 0.0
    %700 = vmatpush1.msra.mxu0 %v668
    %701 = vmatprep.subr.mxu0 0.0
    %702 = vmatpush1.msra.mxu0 %v669
    %703 = vmatprep.subr.mxu0 0.0
    %704 = vmatpush1.msra.mxu0 %v670
    %705 = vmatprep.subr.mxu0 0.0
    %706 = vmatpush1.msra.mxu0 %v671
    %707 = vmatprep.subr.mxu0 0.0
    %708 = vmatpush1.msra.mxu0 %v672
    %709 = vmatprep.subr.mxu0 0.0
    %710 = vmatpush1.msra.mxu0 %v673
    %711 = vmatprep.subr.mxu0 0.0
    %712 = vmatpush1.msra.mxu0 %v674
    %713 = vmatprep.subr.mxu0 0.0
    %714 = vmatpush1.msra.mxu0 %v675
    %715 = vmatprep.subr.mxu0 0.0
    %716 = vmatpush1.msra.mxu0 0.0
    %717 = vmatprep.subr.mxu0 0.0
    %718 = vmatpush1.msra.mxu0 0.0
    %719 = vmatprep.subr.mxu0 0.0
    %720 = vmatpush1.msra.mxu0 0.0
    %721 = vmatprep.subr.mxu0 0.0
    %722 = vmatpush1.msra.mxu0 0.0
    %723 = vmatprep.subr.mxu0 0.0
    %724 = vmatpush1.msra.mxu0 0.0
    %725 = vmatprep.subr.mxu0 0.0
    %726 = vmatpush1.msra.mxu0 0.0
    %727 = vmatprep.subr.mxu0 0.0
    %728 = vmatpush1.msra.mxu0 0.0
    %729 = vmatprep.subr.mxu0 0.0
    %730 = vmatpush1.msra.mxu0 0.0
    %731 = vmatprep.subr.mxu0 0.0
    %732 = vmatpush1.msra.mxu0 0.0
    %733 = vmatprep.subr.mxu0 0.0
    %734 = vmatpush1.msra.mxu0 0.0
    %735 = vmatprep.subr.mxu0 0.0
    %736 = vmatpush1.msra.mxu0 0.0
    %737 = vmatprep.subr.mxu0 0.0
    %738 = vmatpush1.msra.mxu0 0.0
    %739 = vmatprep.subr.mxu0 0.0
    %740 = vmatpush1.msra.mxu0 0.0
    %741 = vmatprep.subr.mxu0 0.0
    %742 = vmatpush1.msra.mxu0 0.0
    %743 = vmatprep.subr.mxu0 0.0
    %744 = vmatpush1.msra.mxu0 0.0
    %745 = vmatprep.subr.mxu0 0.0
    %746 = vmatpush1.msra.mxu0 0.0
    %747 = vmatprep.mubr.f32.mxu0 0.0
    %748 = vmatmul.mubr.f32.gmra.mrb[0].mxu0 %v654
    %v749 = vpop.f32.mrb[0].mxu0
    %v750 = vadd.f32 %v681, %v749
    %v751 = vpop.f32.mrb[0].mxu0
    %752 = vmatprep.mubr.f32.mxu0 0.0
    %753 = vmatmul.mubr.f32.gmra.mrb[0].mxu0 %v659
    %v754 = vpop.f32.mrb[0].mxu0
    %v755 = vadd.f32 %v681, %v754
    %v756 = vpop.f32.mrb[0].mxu0
    %757 = vdwg.mxu0
    %v758 = vadd.f32 %v750, %v755
    %v759 = vmul.f32 %v758, 0.5
    %760 = vst [vmem:[#allocation14] sm:$0xff] %v759
    // Predicated region
    $region74: #{tpu_custom_call.1} parent=1 // pred_check
      _
    $region75: #{tpu_custom_call.1} parent=1 // pred_check_branch
      %762 = sbr.rel (0) target = $region77
    $region76: #{tpu_custom_call.1} parent=1 // pred_region
      %s764 = ssub.s32 128, 128
      %765 = vsyncadd [#allocation4], %s764
      %s767 = sshll.u32 [#allocation14], 4
      %s768 = int_to_ptr.vmem [resolvable:$true] %s767
      %770 = dma.vmem_to_hbm [thread:$0]  %s768, 128, %s11, [#allocation4]
    $region77: #{tpu_custom_call.1} parent=1 // pred_fallthru
      _
    // Predicated region
    $region78: #{tpu_custom_call.1} parent=1 // pred_check
      _
    $region79: #{tpu_custom_call.1} parent=1 // pred_check_branch
      %772 = sbr.rel (0) target = $region81
    $region80: #{tpu_custom_call.1} parent=1 // pred_region
      %773 = dma.done [#allocation4], 128
    $region81: #{tpu_custom_call.1} parent=1 // pred_fallthru
      _
    %774 = vsyncpa [#allocation3], 1
    %775 = vsyncpa [#allocation6], 1
    %776 = vsyncpa [#allocation9], 1
    %777 = vsyncpa [#allocation12], 1
    %778 = vsyncpa [#allocation4], 1

</llo_original>
